<compile_context>
chip_gen: v7x
topology: tpu7x:2x2x1
jax: 0.10.0
libtpu: 0.0.40
codegen_flags: <defaults>
</compile_context>

<pallas_src>
import functools

import jax
import jax.numpy as jnp
from jax.experimental import pallas as pl
from jax.experimental.pallas import tpu as pltpu


def _round_up(x: int, m: int) -> int:
    return ((x + m - 1) // m) * m


# ----------------------------------------------------------------------------
# Pallas kernel: per row-block partial sums of the mask-weighted kernel
# ----------------------------------------------------------------------------
def _mmd_partial_kernel(xr_ref, xc_ref, rowm_ref, colm_ref, out_ref, acc_ref,
                        *, bandwidth: float, p: int, bf16_exp: bool):
    j = pl.program_id(1)

    @pl.when(j == 0)
    def _init():
        acc_ref[...] = jnp.zeros_like(acc_ref)

    xr = xr_ref[...]                               # (TM, 1)  f32
    xc = xc_ref[...]                               # (1, TN)  f32
    d = xr - xc                                    # (TM, TN)
    e = (-bandwidth) * (d * d)
    if bf16_exp:
        k = jnp.exp(e.astype(jnp.bfloat16))        # bf16 EUP + native MXU LHS
    else:
        k = jnp.exp(e)                             # exact f32 path (default)

    # Single MXU contraction over the (large) TN axis:
    #   acc[i, :] += K_tile @ [maj_mask | min_mask]   -> (TM, 2P)
    acc_ref[...] += jnp.dot(k, colm_ref[...],
                            preferred_element_type=jnp.float32)

    @pl.when(j == pl.num_programs(1) - 1)
    def _finalize():
        s = acc_ref[...]                                 # (TM, 2P)
        rowm = rowm_ref[...].astype(jnp.float32)         # (TM, 2P)
        s_maj, s_min = s[:, :p], s[:, p:]
        majr, minr = rowm[:, :p], rowm[:, p:]
        out_ref[0:1, :] = jnp.sum(majr * s_maj, axis=0, keepdims=True)  # S_a
        out_ref[1:2, :] = jnp.sum(minr * s_min, axis=0, keepdims=True)  # S_b
        out_ref[2:3, :] = jnp.sum(majr * s_min, axis=0, keepdims=True)  # S_ab


# ----------------------------------------------------------------------------
# Wrapper: forward pass of MMDFairness
# ----------------------------------------------------------------------------
def mmd_fairness(x: jax.Array,
                 sensitive: jax.Array,
                 majority_minority_pairs,
                 biased: bool = True,
                 bandwidth: float = 1.0,
                 tile: int = 1024,
                 use_bf16_exp: bool = False) -> jax.Array:
    """MMDFairness.forward.

    x: (N,) or (N, 1) predictions.
    sensitive: (N, n_cols) dummy-coded group membership (1 = member).
    majority_minority_pairs: list of (maj_col, [min_col, ...]) like
        SensitiveMap.majority_minority_pairs.
    Returns: (P,) MMD per (majority, minority) pair, stacked in order.
    """
    x = jnp.asarray(x)
    if x.ndim == 1:                       # _validate_shape(x, squeeze=False)
        x = x[:, None]
    assert x.ndim == 2 and x.shape[1] == 1
    n = x.shape[0]

    # Flatten the pair structure (same ordering as the torch loop).
    pair_cols = []
    for maj_idx, min_idxs in majority_minority_pairs:
        for min_idx in min_idxs:
            pair_cols.append((maj_idx, min_idx))
    p = len(pair_cols)
    assert p >= 1

    sens = jnp.asarray(sensitive)
    member = (sens == 1).astype(jnp.float32)       # get_member: member iff == 1
    maj_mask = jnp.stack([member[:, m] for m, _ in pair_cols], axis=1)   # (N, P)
    min_mask = jnp.stack([member[:, m] for _, m in pair_cols], axis=1)   # (N, P)
    n_maj = maj_mask.sum(axis=0)                   # (P,)
    n_min = min_mask.sum(axis=0)
    masks = jnp.concatenate([maj_mask, min_mask], axis=1)               # (N, 2P)

    # Tile / padding choices.  Padded rows/cols have zero masks so contribute
    # nothing; x is padded with 0 so exp() stays finite.
    if n <= tile:
        n_pad = _round_up(max(n, 1), 128)
        blk_j = n_pad                      # single column block
        blk_i = n_pad // 2                 # >=2 row blocks -> both v7x TCs work
    else:
        n_pad = _round_up(n, tile)
        blk_i = blk_j = tile
    pad = n_pad - n
    num_i = n_pad // blk_i
    num_j = n_pad // blk_j

    xf = x.astype(jnp.float32)
    x_row = jnp.pad(xf, ((0, pad), (0, 0)))                  # (n_pad, 1)
    x_col = x_row.reshape(1, n_pad)                          # (1, n_pad)
    mask_dtype = jnp.bfloat16 if use_bf16_exp else jnp.float32
    masks_p = jnp.pad(masks, ((0, pad), (0, 0))).astype(mask_dtype)  # (n_pad, 2P)

    kernel = functools.partial(_mmd_partial_kernel,
                               bandwidth=float(bandwidth), p=p,
                               bf16_exp=use_bf16_exp)

    cost = pl.CostEstimate(
        flops=int(n_pad) * int(n_pad) * (3 + 4 * p),
        transcendentals=int(n_pad) * int(n_pad),
        bytes_accessed=int(4 * n_pad * (num_i + num_j)
                           + 4 * 2 * p * n_pad * (num_i + 1)
                           + 4 * num_i * 3 * p),
    )

    # Headroom for the (blk_i, blk_j) f32 K temporary + double-buffered inputs.
    vmem_limit = (48 if blk_j <= 1024 else 100) * 1024 * 1024

    partial = pl.pallas_call(
        kernel,
        out_shape=jax.ShapeDtypeStruct((num_i, 3, p), jnp.float32),
        grid=(num_i, num_j),
        in_specs=[
            pl.BlockSpec((blk_i, 1), lambda i, j: (i, 0)),       # x rows
            pl.BlockSpec((1, blk_j), lambda i, j: (0, j)),       # x cols
            pl.BlockSpec((blk_i, 2 * p), lambda i, j: (i, 0)),   # row masks [maj|min]
            pl.BlockSpec((blk_j, 2 * p), lambda i, j: (j, 0)),   # col masks [maj|min]
        ],
        out_specs=pl.BlockSpec((None, 3, p), lambda i, j: (i, 0, 0)),
        scratch_shapes=[pltpu.VMEM((blk_i, 2 * p), jnp.float32)],
        compiler_params=pltpu.CompilerParams(
            dimension_semantics=("parallel", "arbitrary"),
            vmem_limit_bytes=vmem_limit),
        cost_estimate=cost,
    )(x_row, x_col, masks_p, masks_p)

    # Tiny O(num_i * P) finish: reduce per-row-block partials and normalize.
    sums = partial.sum(axis=0)                     # (3, P)
    s_maj, s_min, s_cross = sums[0], sums[1], sums[2]
    if biased:
        k_a = s_maj / (n_maj * n_maj)
        k_b = s_min / (n_min * n_min)
    else:
        # TODO(synk): groups with <2 members give inf/NaN here, matching the
        # torch reference's behavior (no guard in MMDFairness.calculate).
        k_a = (s_maj - n_maj) / (n_maj * (n_maj - 1.0))
        k_b = (s_min - n_min) / (n_min * (n_min - 1.0))
    k_ab = s_cross / (n_maj * n_min)
    return k_a + k_b - 2.0 * k_ab                  # (P,)


# ----------------------------------------------------------------------------
# Pure-JAX reference (mirrors the PyTorch gather-then-pdist/cdist computation)
# ----------------------------------------------------------------------------
def mmd_fairness_ref(x, sensitive, majority_minority_pairs,
                     biased=True, bandwidth=1.0):
    x = jnp.asarray(x, jnp.float32).reshape(-1)
    sens = jnp.asarray(sensitive)
    out = []
    gk = lambda d2: jnp.exp(-bandwidth * d2)
    for maj_idx, min_idxs in majority_minority_pairs:
        maj = x[sens[:, maj_idx] == 1]
        for min_idx in min_idxs:
            mino = x[sens[:, min_idx] == 1]
            n_a, n_b = maj.shape[0], mino.shape[0]
            d2_aa = (maj[:, None] - maj[None, :]) ** 2
            d2_bb = (mino[:, None] - mino[None, :]) ** 2
            d2_ab = (maj[:, None] - mino[None, :]) ** 2
            if biased:
                k_a = gk(d2_aa).sum() / (n_a * n_a)
                k_b = gk(d2_bb).sum() / (n_b * n_b)
            else:
                k_a = (gk(d2_aa).sum() - n_a) / (n_a * (n_a - 1))
                k_b = (gk(d2_bb).sum() - n_b) / (n_b * (n_b - 1))
            k_ab = gk(d2_ab).sum() / (n_a * n_b)
            out.append(k_a + k_b - 2 * k_ab)
    return jnp.stack(out)


if __name__ == "__main__":
    # 1) Exact docstring example from MMDFairness: expected ~0.2850
    sensitive_doc = jnp.array([[1, 0], [1, 0], [1, 0], [0, 1], [0, 1], [0, 1]],
                              dtype=jnp.float32)
    pred_doc = jnp.array([0., 1., -1., 0., 2., -2.], dtype=jnp.float32)
    pairs_doc = [(0, [1])]
    out_doc = jax.block_until_ready(mmd_fairness(pred_doc, sensitive_doc, pairs_doc))
    assert out_doc.shape == (1,)
    assert abs(float(out_doc[0]) - 0.2850) < 1e-3

    # 2) Small randomized case: N=8, 3 sensitive columns, majority=col0,
    #    minorities=[1, 2]  ->  P=2 pairs
    key = jax.random.PRNGKey(0)
    N = 8
    pred = jax.random.normal(key, (N,), dtype=jnp.float32)
    group = jnp.array([0, 0, 0, 1, 1, 1, 2, 2])
    sensitive = jax.nn.one_hot(group, 3, dtype=jnp.float32)
    pairs = [(0, [1, 2])]

    out_b = jax.block_until_ready(
        mmd_fairness(pred, sensitive, pairs, biased=True, bandwidth=1.0))
    ref_b = mmd_fairness_ref(pred, sensitive, pairs, biased=True, bandwidth=1.0)
    assert out_b.shape == (2,)
    assert jnp.allclose(out_b, ref_b, atol=1e-5, rtol=1e-5)

    out_u = jax.block_until_ready(
        mmd_fairness(pred, sensitive, pairs, biased=False, bandwidth=0.5))
    ref_u = mmd_fairness_ref(pred, sensitive, pairs, biased=False, bandwidth=0.5)
    assert jnp.allclose(out_u, ref_u, atol=1e-5, rtol=1e-5)

    # 3) Multi-block path (exercises the j-accumulation and padding):
    #    N=300 with a small tile=128 -> grid (3, 3), blocks of 128.
    key2 = jax.random.PRNGKey(0)
    N2 = 300
    pred2 = jax.random.normal(key2, (N2,), dtype=jnp.float32)
    group2 = jnp.arange(N2) % 3
    sensitive2 = jax.nn.one_hot(group2, 3, dtype=jnp.float32)
    out_m = jax.block_until_ready(
        mmd_fairness(pred2, sensitive2, pairs, biased=True, bandwidth=1.0, tile=128))
    ref_m = mmd_fairness_ref(pred2, sensitive2, pairs, biased=True, bandwidth=1.0)
    assert jnp.allclose(out_m, ref_m, atol=1e-4, rtol=1e-4)

    print("KERNEL_OK")
</pallas_src>

<mosaic_0001>
module attributes {stable_mosaic.version = 11 : i64} {
  func.func @_mmd_partial_kernel(%arg0: i32, %arg1: i32, %arg2: memref<64x1xf32, #tpu.memory_space<vmem>>, %arg3: memref<1x128xf32, #tpu.memory_space<vmem>>, %arg4: memref<64x2xf32, #tpu.memory_space<vmem>>, %arg5: memref<128x2xf32, #tpu.memory_space<vmem>>, %arg6: memref<1x3x1xf32, #tpu.memory_space<vmem>>, %arg7: memref<64x2xf32, #tpu.memory_space<vmem>>) attributes {dimension_semantics = [#tpu.dimension_semantics<parallel>, #tpu.dimension_semantics<arbitrary>], iteration_bounds = array<i64: 2, 1>, scalar_prefetch = 0 : i64, scratch_operands = 1 : i64, tpu.core_type = #tpu.core_type<tc>, window_params = [{transform_indices = @transform_0, window_bounds = array<i64: 64, 1>}, {transform_indices = @transform_1, window_bounds = array<i64: 1, 128>}, {transform_indices = @transform_2, window_bounds = array<i64: 64, 2>}, {transform_indices = @transform_3, window_bounds = array<i64: 128, 2>}, {transform_indices = @transform_4, window_bounds = array<i64: 1, 3, 1>}]} {
    %c0_i32 = arith.constant 0 : i32
    %0 = arith.cmpi eq, %arg1, %c0_i32 : i32
    %1 = arith.extui %0 : i1 to i32
    %c0_i32_0 = arith.constant 0 : i32
    %2 = arith.cmpi ne, %1, %c0_i32_0 : i32
    scf.if %2 {
      %cst_13 = arith.constant 0.000000e+00 : f32
      %20 = vector.broadcast %cst_13 : f32 to vector<64x2xf32>
      %c0_14 = arith.constant 0 : index
      %c0_15 = arith.constant 0 : index
      %21 = vector.load %arg7[%c0_14, %c0_15] : memref<64x2xf32, #tpu.memory_space<vmem>>, vector<64x2xf32>
      tpu.vector_store %arg7[%c0_14, %c0_15], %20 {strides = array<i32>} : memref<64x2xf32, #tpu.memory_space<vmem>>, vector<64x2xf32>,
    } else {
    }
    %c0 = arith.constant 0 : index
    %c0_1 = arith.constant 0 : index
    %3 = vector.load %arg2[%c0, %c0_1] : memref<64x1xf32, #tpu.memory_space<vmem>>, vector<64x1xf32>
    %c0_2 = arith.constant 0 : index
    %c0_3 = arith.constant 0 : index
    %4 = vector.load %arg3[%c0_2, %c0_3] : memref<1x128xf32, #tpu.memory_space<vmem>>, vector<1x128xf32>
    %5 = vector.broadcast %3 : vector<64x1xf32> to vector<64x128xf32>
    %6 = vector.broadcast %4 : vector<1x128xf32> to vector<64x128xf32>
    %7 = arith.subf %5, %6 : vector<64x128xf32>
    %8 = arith.mulf %7, %7 : vector<64x128xf32>
    %cst = arith.constant -1.000000e+00 : f32
    %9 = vector.broadcast %cst : f32 to vector<64x128xf32>
    %10 = arith.mulf %9, %8 : vector<64x128xf32>
    %11 = math.exp %10 : vector<64x128xf32>
    %c0_4 = arith.constant 0 : index
    %c0_5 = arith.constant 0 : index
    %12 = vector.load %arg7[%c0_4, %c0_5] : memref<64x2xf32, #tpu.memory_space<vmem>>, vector<64x2xf32>
    %c0_6 = arith.constant 0 : index
    %c0_7 = arith.constant 0 : index
    %13 = vector.load %arg5[%c0_6, %c0_7] : memref<128x2xf32, #tpu.memory_space<vmem>>, vector<128x2xf32>
    %cst_8 = arith.constant dense<0.000000e+00> : vector<64x2xf32>
    %14 = tpu.matmul %11, %13, %cst_8 {dimension_numbers = #tpu.dot_dimension_numbers<[1], [0], [0], [1], [0, 0, 1, 1], [], []>} : vector<64x128xf32>, vector<128x2xf32>, vector<64x2xf32> -> vector<64x2xf32>
    %15 = arith.addf %12, %14 : vector<64x2xf32>
    %c0_9 = arith.constant 0 : index
    %c0_10 = arith.constant 0 : index
    %16 = vector.load %arg7[%c0_9, %c0_10] : memref<64x2xf32, #tpu.memory_space<vmem>>, vector<64x2xf32>
    tpu.vector_store %arg7[%c0_9, %c0_10], %15 {strides = array<i32>} : memref<64x2xf32, #tpu.memory_space<vmem>>, vector<64x2xf32>,
    %c0_i32_11 = arith.constant 0 : i32
    %17 = arith.cmpi eq, %arg1, %c0_i32_11 : i32
    %18 = arith.extui %17 : i1 to i32
    %c0_i32_12 = arith.constant 0 : i32
    %19 = arith.cmpi ne, %18, %c0_i32_12 : i32
    scf.if %19 {
      %c0_13 = arith.constant 0 : index
      %c0_14 = arith.constant 0 : index
      %20 = vector.load %arg7[%c0_13, %c0_14] : memref<64x2xf32, #tpu.memory_space<vmem>>, vector<64x2xf32>
      %c0_15 = arith.constant 0 : index
      %c0_16 = arith.constant 0 : index
      %21 = vector.load %arg4[%c0_15, %c0_16] : memref<64x2xf32, #tpu.memory_space<vmem>>, vector<64x2xf32>
      %22 = vector.extract_strided_slice %20 {offsets = [0, 0], sizes = [64, 1], strides = [1, 1]} : vector<64x2xf32> to vector<64x1xf32>
      %23 = vector.extract_strided_slice %20 {offsets = [0, 1], sizes = [64, 1], strides = [1, 1]} : vector<64x2xf32> to vector<64x1xf32>
      %24 = vector.extract_strided_slice %21 {offsets = [0, 0], sizes = [64, 1], strides = [1, 1]} : vector<64x2xf32> to vector<64x1xf32>
      %25 = vector.extract_strided_slice %21 {offsets = [0, 1], sizes = [64, 1], strides = [1, 1]} : vector<64x2xf32> to vector<64x1xf32>
      %26 = arith.mulf %24, %22 : vector<64x1xf32>
      %cst_17 = arith.constant dense<0.000000e+00> : vector<1xf32>
      %27 = vector.multi_reduction <add>, %26, %cst_17 [0] : vector<64x1xf32> to vector<1xf32>
      %28 = vector.shape_cast %27 : vector<1xf32> to vector<1x1xf32>
      %c0_18 = arith.constant 0 : index
      %c0_19 = arith.constant 0 : index
      %c0_20 = arith.constant 0 : index
      %29 = vector.load %arg6[%c0_18, %c0_19, %c0_20] : memref<1x3x1xf32, #tpu.memory_space<vmem>>, vector<1x1x1xf32>
      %30 = vector.shape_cast %29 : vector<1x1x1xf32> to vector<1x1xf32>
      %31 = vector.shape_cast %28 : vector<1x1xf32> to vector<1x1x1xf32>
      tpu.vector_store %arg6[%c0_18, %c0_19, %c0_20], %31 {strides = array<i32>} : memref<1x3x1xf32, #tpu.memory_space<vmem>>, vector<1x1x1xf32>,
      %32 = arith.mulf %25, %23 : vector<64x1xf32>
      %cst_21 = arith.constant dense<0.000000e+00> : vector<1xf32>
      %33 = vector.multi_reduction <add>, %32, %cst_21 [0] : vector<64x1xf32> to vector<1xf32>
      %34 = vector.shape_cast %33 : vector<1xf32> to vector<1x1xf32>
      %c0_22 = arith.constant 0 : index
      %c1 = arith.constant 1 : index
      %c0_23 = arith.constant 0 : index
      %35 = vector.load %arg6[%c0_22, %c1, %c0_23] : memref<1x3x1xf32, #tpu.memory_space<vmem>>, vector<1x1x1xf32>
      %36 = vector.shape_cast %35 : vector<1x1x1xf32> to vector<1x1xf32>
      %37 = vector.shape_cast %34 : vector<1x1xf32> to vector<1x1x1xf32>
      tpu.vector_store %arg6[%c0_22, %c1, %c0_23], %37 {strides = array<i32>} : memref<1x3x1xf32, #tpu.memory_space<vmem>>, vector<1x1x1xf32>,
      %38 = arith.mulf %24, %23 : vector<64x1xf32>
      %cst_24 = arith.constant dense<0.000000e+00> : vector<1xf32>
      %39 = vector.multi_reduction <add>, %38, %cst_24 [0] : vector<64x1xf32> to vector<1xf32>
      %40 = vector.shape_cast %39 : vector<1xf32> to vector<1x1xf32>
      %c0_25 = arith.constant 0 : index
      %c2 = arith.constant 2 : index
      %c0_26 = arith.constant 0 : index
      %41 = vector.load %arg6[%c0_25, %c2, %c0_26] : memref<1x3x1xf32, #tpu.memory_space<vmem>>, vector<1x1x1xf32>
      %42 = vector.shape_cast %41 : vector<1x1x1xf32> to vector<1x1xf32>
      %43 = vector.shape_cast %40 : vector<1x1xf32> to vector<1x1x1xf32>
      tpu.vector_store %arg6[%c0_25, %c2, %c0_26], %43 {strides = array<i32>} : memref<1x3x1xf32, #tpu.memory_space<vmem>>, vector<1x1x1xf32>,
    } else {
    }
    return
  }
  func.func @transform_0(%arg0: i32, %arg1: i32) -> (i32, i32) {
    %c0_i32 = arith.constant 0 : i32
    %c0_i32_0 = arith.constant 0 : i32
    return %arg0, %c0_i32 : i32, i32
  }
  func.func @transform_1(%arg0: i32, %arg1: i32) -> (i32, i32) {
    %c0_i32 = arith.constant 0 : i32
    %c0_i32_0 = arith.constant 0 : i32
    return %c0_i32, %arg1 : i32, i32
  }
  func.func @transform_2(%arg0: i32, %arg1: i32) -> (i32, i32) {
    %c0_i32 = arith.constant 0 : i32
    %c0_i32_0 = arith.constant 0 : i32
    return %arg0, %c0_i32 : i32, i32
  }
  func.func @transform_3(%arg0: i32, %arg1: i32) -> (i32, i32) {
    %c0_i32 = arith.constant 0 : i32
    %c0_i32_0 = arith.constant 0 : i32
    return %arg1, %c0_i32 : i32, i32
  }
  func.func @transform_4(%arg0: i32, %arg1: i32) -> (i32, i32, i32) {
    %c0_i32 = arith.constant 0 : i32
    %c0_i32_0 = arith.constant 0 : i32
    %c0_i32_1 = arith.constant 0 : i32
    return %arg0, %c0_i32, %c0_i32_0 : i32, i32, i32
  }
}

</mosaic_0001>

<llo_original>
// kernel: tpu_custom_call.1
$region0: #{tpu_custom_call.1}
  #allocation0 [shape = 'u32[]', space=smem, size = 0x4, offset = 0x4, fixed_abs, tag = 'smem constant byte address 0x4 - core index']
  #allocation1 [shape = 'u32[144,128]{1,0:T(1,128)}', space=vmem, size = 0x12000, scoped, tag = 'internal scratch']
  #allocation2 [shape = 'f32[64,2]{1,0:T(8,128)}', space=vmem, size = 0x8000, scoped, tag = 'scratch operand']
  %s0 = inlined_call_operand.vmem [shape: f32[128,1], index: 0, kind: input, shape index: {}]
  %s1 = inlined_call_operand.vmem [shape: f32[1,128], index: 1, kind: input, shape index: {}]
  %s2 = inlined_call_operand.vmem [shape: f32[128,2], index: 2, kind: input, shape index: {}]
  %s3 = inlined_call_operand.vmem [shape: f32[128,2], index: 3, kind: input, shape index: {}]
  %s4 = inlined_call_operand.vmem [shape: f32[2,3,1], index: 4, kind: output, shape index: {}]
  %s5 = sld [smem:[#allocation0]]
  $region57: #{tpu_custom_call.1} parent=0
    _
  %s7 = ssub.s32 1, %s5
  %s8 = scalar_select 0, %s7, %s5
  loop: start=0, step=1, limit=4
  $region2: #{tpu_custom_call.1} parent=0 // loop_pre_header
    _
  $region3: #{tpu_custom_call.1} parent=0 // loop_header
    %s10 = sphi 0, %s14
    %p11 = scmp.ge.s32.totalorder %s10, 4
    %s17 = sphi 0, %s29
    %s18 = sphi 0, %s25
    %s19 = sphi 0, %s17
    %s20 = sphi 0, %s18
    %s21 = sphi 0, %s19
    %s22 = sphi 0, %s20
    %s32 = sphi 0, %s34
    %s35 = sphi 0, %s32
    %s36 = sphi 0, %s35
    %s52 = sphi 0, %s36
    %s58 = sphi 0, %s60
    %s61 = sphi 0, %s58
    %s62 = sphi 0, %s61
    %s78 = sphi 0, %s62
    %s84 = sphi 0, %s86
    %s87 = sphi 0, %s84
    %s88 = sphi 0, %s87
    %s104 = sphi 0, %s88
    %s110 = sphi 0, %s112
    %s113 = sphi 0, %s110
    %s114 = sphi 0, %s113
    %s130 = sphi 0, %s114
    %s136 = sphi 0, %s138
    %s139 = sphi 0, %s136
    %s140 = sphi 0, %s139
    %s156 = sphi 0, %s140
  $region4: #{tpu_custom_call.1} parent=0 // loop_header_branch
    %13 = sbr.rel (%p11) target = $region8
  $region5: #{tpu_custom_call.1} parent=0 // loop_body
    %s15 = ssub.s32 %s10, 1
    %s16 = ssub.s32 %s10, 2
    %s23 = sadd.s32 1, %s18
    %p24 = scmp.ge.s32.totalorder %s23, 1
    %s25 = scalar_select %p24, 0, %s23
    %s26 = sadd.s32 1, %s17
    %s27 = scalar_select %p24, %s26, %s17
    %p28 = scmp.ge.s32.totalorder %s27, 2
    %s29 = scalar_select %p28, 0, %s27
    %s30 = ssub.s32 %s17, %s29
    %p31 = scmp.eq.s32.totalorder %s30, 0
    %s33 = sadd.s32 %s32, 1
    %s34 = scalar_select %p31, %s32, %s33
    %p37 = pneg %p31
    %p38 = scmp.eq.s32.totalorder %s10, 1
    %p39 = por %p37, %p38
    %p40 = scmp.ne.s32.totalorder %s32, %s35
    %p41 = scmp.eq.s32.totalorder %s10, 0
    %p42 = por %p40, %p41
    %p43 = scmp.ne.s32.totalorder %s32, %s35
    %p44 = scmp.eq.s32.totalorder %s15, 1
    %p45 = por %p43, %p44
    %p46 = scmp.ne.s32.totalorder %s35, %s36
    %p47 = scmp.eq.s32.totalorder %s15, 0
    %p48 = por %p46, %p47
    %p49 = scmp.ne.s32.totalorder %s35, %s36
    %p50 = scmp.eq.s32.totalorder %s16, 1
    %p51 = por %p49, %p50
    %p53 = scmp.ne.s32.totalorder %s36, %s52
    %p54 = scmp.eq.s32.totalorder %s16, 0
    %p55 = por %p53, %p54
    %s56 = ssub.s32 %s18, %s25
    %p57 = scmp.eq.s32.totalorder %s56, 0
    %s59 = sadd.s32 %s58, 1
    %s60 = scalar_select %p57, %s58, %s59
    %p63 = pneg %p57
    %p64 = scmp.eq.s32.totalorder %s10, 1
    %p65 = por %p63, %p64
    %p66 = scmp.ne.s32.totalorder %s58, %s61
    %p67 = scmp.eq.s32.totalorder %s10, 0
    %p68 = por %p66, %p67
    %p69 = scmp.ne.s32.totalorder %s58, %s61
    %p70 = scmp.eq.s32.totalorder %s15, 1
    %p71 = por %p69, %p70
    %p72 = scmp.ne.s32.totalorder %s61, %s62
    %p73 = scmp.eq.s32.totalorder %s15, 0
    %p74 = por %p72, %p73
    %p75 = scmp.ne.s32.totalorder %s61, %s62
    %p76 = scmp.eq.s32.totalorder %s16, 1
    %p77 = por %p75, %p76
    %p79 = scmp.ne.s32.totalorder %s62, %s78
    %p80 = scmp.eq.s32.totalorder %s16, 0
    %p81 = por %p79, %p80
    %s82 = ssub.s32 %s17, %s29
    %p83 = scmp.eq.s32.totalorder %s82, 0
    %s85 = sadd.s32 %s84, 1
    %s86 = scalar_select %p83, %s84, %s85
    %p89 = pneg %p83
    %p90 = scmp.eq.s32.totalorder %s10, 1
    %p91 = por %p89, %p90
    %p92 = scmp.ne.s32.totalorder %s84, %s87
    %p93 = scmp.eq.s32.totalorder %s10, 0
    %p94 = por %p92, %p93
    %p95 = scmp.ne.s32.totalorder %s84, %s87
    %p96 = scmp.eq.s32.totalorder %s15, 1
    %p97 = por %p95, %p96
    %p98 = scmp.ne.s32.totalorder %s87, %s88
    %p99 = scmp.eq.s32.totalorder %s15, 0
    %p100 = por %p98, %p99
    %p101 = scmp.ne.s32.totalorder %s87, %s88
    %p102 = scmp.eq.s32.totalorder %s16, 1
    %p103 = por %p101, %p102
    %p105 = scmp.ne.s32.totalorder %s88, %s104
    %p106 = scmp.eq.s32.totalorder %s16, 0
    %p107 = por %p105, %p106
    %s108 = ssub.s32 %s18, %s25
    %p109 = scmp.eq.s32.totalorder %s108, 0
    %s111 = sadd.s32 %s110, 1
    %s112 = scalar_select %p109, %s110, %s111
    %p115 = pneg %p109
    %p116 = scmp.eq.s32.totalorder %s10, 1
    %p117 = por %p115, %p116
    %p118 = scmp.ne.s32.totalorder %s110, %s113
    %p119 = scmp.eq.s32.totalorder %s10, 0
    %p120 = por %p118, %p119
    %p121 = scmp.ne.s32.totalorder %s110, %s113
    %p122 = scmp.eq.s32.totalorder %s15, 1
    %p123 = por %p121, %p122
    %p124 = scmp.ne.s32.totalorder %s113, %s114
    %p125 = scmp.eq.s32.totalorder %s15, 0
    %p126 = por %p124, %p125
    %p127 = scmp.ne.s32.totalorder %s113, %s114
    %p128 = scmp.eq.s32.totalorder %s16, 1
    %p129 = por %p127, %p128
    %p131 = scmp.ne.s32.totalorder %s114, %s130
    %p132 = scmp.eq.s32.totalorder %s16, 0
    %p133 = por %p131, %p132
    %s134 = ssub.s32 %s17, %s29
    %p135 = scmp.eq.s32.totalorder %s134, 0
    %s137 = sadd.s32 %s136, 1
    %s138 = scalar_select %p135, %s136, %s137
    %p141 = pneg %p135
    %p142 = scmp.eq.s32.totalorder %s10, 1
    %p143 = por %p141, %p142
    %p144 = scmp.ne.s32.totalorder %s136, %s139
    %p145 = scmp.eq.s32.totalorder %s10, 0
    %p146 = por %p144, %p145
    %p147 = scmp.ne.s32.totalorder %s136, %s139
    %p148 = scmp.eq.s32.totalorder %s15, 1
    %p149 = por %p147, %p148
    %p150 = scmp.ne.s32.totalorder %s139, %s140
    %p151 = scmp.eq.s32.totalorder %s15, 0
    %p152 = por %p150, %p151
    %p153 = scmp.ne.s32.totalorder %s139, %s140
    %p154 = scmp.eq.s32.totalorder %s16, 1
    %p155 = por %p153, %p154
    %p157 = scmp.ne.s32.totalorder %s140, %s156
    %p158 = scmp.eq.s32.totalorder %s16, 0
    %p159 = por %p157, %p158
    %p160 = scmp.le.s32.totalorder 1, %s10
    %p161 = scmp.lt.s32.totalorder %s10, 3
    %p162 = pnand %p160, %p161
    %p163 = pneg %p162
    // Predicated region
    $region9: #{tpu_custom_call.1} parent=5 // pred_check
      _
    $region10: #{tpu_custom_call.1} parent=5 // pred_check_branch
      %165 = sbr.rel (%p162) target = $region12
    $region11: #{tpu_custom_call.1} parent=5 // pred_region
      %s166 = ssub.s32 %s10, 1
      // Predicated region
      $region13: #{tpu_custom_call.1} parent=11 // pred_check
        %p167 = pneg %p74
      $region14: #{tpu_custom_call.1} parent=11 // pred_check_branch
        %169 = sbr.rel (%p167) target = $region16
      $region15: #{tpu_custom_call.1} parent=11 // pred_region
        %p170 = scmp.lt.s32.totalorder %s20, 0
        %s171 = scalar_select %p170, %s20, 0
        %s172 = scalar_lea.vmem %s1, %s171
      $region16: #{tpu_custom_call.1} parent=11 // pred_fallthru
        _
      // Predicated region
      $region17: #{tpu_custom_call.1} parent=11 // pred_check
        %p173 = pneg %p126
      $region18: #{tpu_custom_call.1} parent=11 // pred_check_branch
        %175 = sbr.rel (%p173) target = $region20
      $region19: #{tpu_custom_call.1} parent=11 // pred_region
        %s176 = smul.u32 16, %s20
        %p177 = scmp.lt.s32.totalorder %s176, 15
        %s178 = scalar_select %p177, %s176, 15
        %s179 = smul.addr %s178, 8
        %s180 = scalar_lea.vmem %s3, %s179
        %s181 = smul.u32 16, %s20
      $region20: #{tpu_custom_call.1} parent=11 // pred_fallthru
        _
    $region12: #{tpu_custom_call.1} parent=5 // pred_fallthru
      _
    %p182 = scmp.lt.s32.totalorder %s10, 2
    // Predicated region
    $region21: #{tpu_custom_call.1} parent=5 // pred_check
      %p183 = pneg %p182
    $region22: #{tpu_custom_call.1} parent=5 // pred_check_branch
      %185 = sbr.rel (%p183) target = $region24
    $region23: #{tpu_custom_call.1} parent=5 // pred_region
      // Predicated region
      $region25: #{tpu_custom_call.1} parent=23 // pred_check
        %p186 = pneg %p42
      $region26: #{tpu_custom_call.1} parent=23 // pred_check_branch
        %188 = sbr.rel (%p186) target = $region28
      $region27: #{tpu_custom_call.1} parent=23 // pred_region
        %s189 = smul.u32 8, %s17
        %p190 = scmp.lt.s32.totalorder %s189, 15
        %s191 = scalar_select %p190, %s189, 15
        %s192 = smul.addr %s191, 8
        %s193 = scalar_lea.vmem %s0, %s192
        %s194 = smul.u32 8, %s17
      $region28: #{tpu_custom_call.1} parent=23 // pred_fallthru
        _
      // Predicated region
      $region29: #{tpu_custom_call.1} parent=23 // pred_check
        %p195 = pneg %p94
      $region30: #{tpu_custom_call.1} parent=23 // pred_check_branch
        %197 = sbr.rel (%p195) target = $region32
      $region31: #{tpu_custom_call.1} parent=23 // pred_region
        %s198 = smul.u32 8, %s17
        %p199 = scmp.lt.s32.totalorder %s198, 15
        %s200 = scalar_select %p199, %s198, 15
        %s201 = smul.addr %s200, 8
        %s202 = scalar_lea.vmem %s2, %s201
        %s203 = smul.u32 8, %s17
      $region32: #{tpu_custom_call.1} parent=23 // pred_fallthru
        _
    $region24: #{tpu_custom_call.1} parent=5 // pred_fallthru
      _
    %p204 = scmp.le.s32.totalorder 1, %s10
    %p205 = scmp.lt.s32.totalorder %s10, 3
    %p206 = pnand %p204, %p205
    %p207 = pneg %p206
    // Predicated region
    $region33: #{tpu_custom_call.1} parent=5 // pred_check
      _
    $region34: #{tpu_custom_call.1} parent=5 // pred_check_branch
      %209 = sbr.rel (%p206) target = $region36
    $region35: #{tpu_custom_call.1} parent=5 // pred_region
      %s210 = ssub.s32 %s10, 1
      %s211 = smul.u32 8, %s19
      %p212 = scmp.lt.s32.totalorder %s211, 15
      %s213 = scalar_select %p212, %s211, 15
      %s214 = smul.addr %s213, 8
      %s215 = scalar_lea.vmem %s0, %s214
      %p216 = pneg %p48
      %p217 = pneg %p45
      %p218 = scmp.lt.s32.totalorder %s20, 0
      %s219 = scalar_select %p218, %s20, 0
      %s220 = scalar_lea.vmem %s1, %s219
      %p221 = pneg %p74
      %p222 = pneg %p71
      %s223 = smul.u32 8, %s19
      %p224 = scmp.lt.s32.totalorder %s223, 15
      %s225 = scalar_select %p224, %s223, 15
      %s226 = smul.addr %s225, 8
      %s227 = scalar_lea.vmem %s2, %s226
      %p228 = pneg %p100
      %p229 = pneg %p97
      %s230 = smul.u32 16, %s20
      %p231 = scmp.lt.s32.totalorder %s230, 15
      %s232 = scalar_select %p231, %s230, 15
      %s233 = smul.addr %s232, 8
      %s234 = scalar_lea.vmem %s3, %s233
      %p235 = pneg %p126
      %p236 = pneg %p123
      %p237 = pneg %p152
      %p238 = pneg %p149
      %p239 = scmp.lt.s32.totalorder %s19, 1
      %s240 = scalar_select %p239, %s19, 1
      %s241 = smul.addr %s240, 4
      %s242 = scalar_lea.vmem %s4, %s241
      %s243 = smul.u32 8, %s19
      %p244 = scmp.lt.s32.totalorder %s243, 15
      %s245 = scalar_select %p244, %s243, 15
      %s246 = smul.addr %s245, 8
      %s247 = scalar_lea.vmem %s0, %s246
      %s248 = smul.u32 8, %s19
      %p249 = scmp.lt.s32.totalorder %s20, 0
      %s250 = scalar_select %p249, %s20, 0
      %s251 = scalar_lea.vmem %s1, %s250
      %s252 = smul.u32 8, %s19
      %p253 = scmp.lt.s32.totalorder %s252, 15
      %s254 = scalar_select %p253, %s252, 15
      %s255 = smul.addr %s254, 8
      %s256 = scalar_lea.vmem %s2, %s255
      %s257 = smul.u32 8, %s19
      %s258 = smul.u32 16, %s20
      %p259 = scmp.lt.s32.totalorder %s258, 15
      %s260 = scalar_select %p259, %s258, 15
      %s261 = smul.addr %s260, 8
      %s262 = scalar_lea.vmem %s3, %s261
      %s263 = smul.u32 16, %s20
      %p264 = scmp.lt.s32.totalorder %s19, 1
      %s265 = scalar_select %p264, %s19, 1
      %s266 = smul.addr %s265, 4
      %s267 = scalar_lea.vmem %s4, %s266
      %p268 = scmp.eq.s32.totalorder %s20, 0
      // Predicated region
      $region37: #{tpu_custom_call.1} parent=35 // pred_check
        %p269 = pneg %p268
      $region38: #{tpu_custom_call.1} parent=35 // pred_check_branch
        %271 = sbr.rel (%p269) target = $region40
      $region39: #{tpu_custom_call.1} parent=35 // pred_region
        %vm272 = vcmask 15360
        %273 = vst.msk [vmem:[#allocation2] sm:$0xff] %vm272, 0.0
        %274 = vst.msk [vmem:[#allocation2 + $0x8] sm:$0xff] %vm272, 0.0
        %275 = vst.msk [vmem:[#allocation2 + $0x10] sm:$0xff] %vm272, 0.0
        %276 = vst.msk [vmem:[#allocation2 + $0x18] sm:$0xff] %vm272, 0.0
        %277 = vst.msk [vmem:[#allocation2 + $0x20] sm:$0xff] %vm272, 0.0
        %278 = vst.msk [vmem:[#allocation2 + $0x28] sm:$0xff] %vm272, 0.0
        %279 = vst.msk [vmem:[#allocation2 + $0x30] sm:$0xff] %vm272, 0.0
        %280 = vst.msk [vmem:[#allocation2 + $0x38] sm:$0xff] %vm272, 0.0
      $region40: #{tpu_custom_call.1} parent=35 // pred_fallthru
        _
      %v281 = vld [vmem:[%s247] sm:$0xff]
      %v282 = vld [vmem:[%s247 + $0x8] sm:$0xff]
      %v283 = vld [vmem:[%s247 + $0x10] sm:$0xff]
      %v284 = vld [vmem:[%s247 + $0x18] sm:$0xff]
      %v285 = vld [vmem:[%s247 + $0x20] sm:$0xff]
      %v286 = vld [vmem:[%s247 + $0x28] sm:$0xff]
      %v287 = vld [vmem:[%s247 + $0x30] sm:$0xff]
      %v288 = vld [vmem:[%s247 + $0x38] sm:$0xff]
      %v289 = vld [vmem:[%s251] sm:$0x1]
      %291 = vset.pattern.permute.xlu0 0
      %292 = vperm.xlu0 %291, %v281
      %v293 = vpop.permute.xlu0 %292
      %296 = vset.pattern.permute.xlu0 0
      %297 = vperm.xlu0 %296, %v282
      %v298 = vpop.permute.xlu0 %297
      %301 = vset.pattern.permute.xlu0 0
      %302 = vperm.xlu0 %301, %v283
      %v303 = vpop.permute.xlu0 %302
      %306 = vset.pattern.permute.xlu0 0
      %307 = vperm.xlu0 %306, %v284
      %v308 = vpop.permute.xlu0 %307
      %311 = vset.pattern.permute.xlu0 0
      %312 = vperm.xlu0 %311, %v285
      %v313 = vpop.permute.xlu0 %312
      %316 = vset.pattern.permute.xlu0 0
      %317 = vperm.xlu0 %316, %v286
      %v318 = vpop.permute.xlu0 %317
      %321 = vset.pattern.permute.xlu0 0
      %322 = vperm.xlu0 %321, %v287
      %v323 = vpop.permute.xlu0 %322
      %326 = vset.pattern.permute.xlu0 0
      %327 = vperm.xlu0 %326, %v288
      %v328 = vpop.permute.xlu0 %327
      %v331 = vlaneseq
      %v332 = vshrl.u32 %v331, 7
      %v333 = vsub.s32 0, %v332
      %v334 = vrot.slane %v289, %v333
      %v336 = vsub.f32 %v293, %v334
      %v337 = vsub.f32 %v298, %v334
      %v338 = vsub.f32 %v303, %v334
      %v339 = vsub.f32 %v308, %v334
      %v340 = vsub.f32 %v313, %v334
      %v341 = vsub.f32 %v318, %v334
      %v342 = vsub.f32 %v323, %v334
      %v343 = vsub.f32 %v328, %v334
      %v344 = vmul.f32 %v336, %v336
      %v345 = vmul.f32 %v337, %v337
      %v346 = vmul.f32 %v338, %v338
      %v347 = vmul.f32 %v339, %v339
      %v348 = vmul.f32 %v340, %v340
      %v349 = vmul.f32 %v341, %v341
      %v350 = vmul.f32 %v342, %v342
      %v351 = vmul.f32 %v343, %v343
      %v352 = vmul.f32 %v344, -1.0
      %v353 = vmul.f32 %v345, -1.0
      %v354 = vmul.f32 %v346, -1.0
      %v355 = vmul.f32 %v347, -1.0
      %v356 = vmul.f32 %v348, -1.0
      %v357 = vmul.f32 %v349, -1.0
      %v358 = vmul.f32 %v350, -1.0
      %v359 = vmul.f32 %v351, -1.0
      %v360 = vmul.f32 %v352, 1.442695
      %v361 = vpow.pop %v360
      %v362 = vmul.f32 %v353, 1.442695
      %v363 = vpow.pop %v362
      %v364 = vmul.f32 %v354, 1.442695
      %v365 = vpow.pop %v364
      %v366 = vmul.f32 %v355, 1.442695
      %v367 = vpow.pop %v366
      %v368 = vmul.f32 %v356, 1.442695
      %v369 = vpow.pop %v368
      %v370 = vmul.f32 %v357, 1.442695
      %v371 = vpow.pop %v370
      %v372 = vmul.f32 %v358, 1.442695
      %v373 = vpow.pop %v372
      %v374 = vmul.f32 %v359, 1.442695
      %v375 = vpow.pop %v374
      %v376 = vld [vmem:[#allocation2] sm:$0xff]
      %v377 = vld [vmem:[#allocation2 + $0x8] sm:$0xff]
      %v378 = vld [vmem:[#allocation2 + $0x10] sm:$0xff]
      %v379 = vld [vmem:[#allocation2 + $0x18] sm:$0xff]
      %v380 = vld [vmem:[#allocation2 + $0x20] sm:$0xff]
      %v381 = vld [vmem:[#allocation2 + $0x28] sm:$0xff]
      %v382 = vld [vmem:[#allocation2 + $0x30] sm:$0xff]
      %v383 = vld [vmem:[#allocation2 + $0x38] sm:$0xff]
      %v384 = vld [vmem:[%s262] sm:$0xff]
      %v385 = vld [vmem:[%s262 + $0x8] sm:$0xff]
      %v386 = vld [vmem:[%s262 + $0x10] sm:$0xff]
      %v387 = vld [vmem:[%s262 + $0x18] sm:$0xff]
      %v388 = vld [vmem:[%s262 + $0x20] sm:$0xff]
      %v389 = vld [vmem:[%s262 + $0x28] sm:$0xff]
      %v390 = vld [vmem:[%s262 + $0x30] sm:$0xff]
      %v391 = vld [vmem:[%s262 + $0x38] sm:$0xff]
      %v392 = vld [vmem:[%s262 + $0x40] sm:$0xff]
      %v393 = vld [vmem:[%s262 + $0x48] sm:$0xff]
      %v394 = vld [vmem:[%s262 + $0x50] sm:$0xff]
      %v395 = vld [vmem:[%s262 + $0x58] sm:$0xff]
      %v396 = vld [vmem:[%s262 + $0x60] sm:$0xff]
      %v397 = vld [vmem:[%s262 + $0x68] sm:$0xff]
      %v398 = vld [vmem:[%s262 + $0x70] sm:$0xff]
      %v399 = vld [vmem:[%s262 + $0x78] sm:$0xff]
      %400 = vmatprep.subr.mxu0 0.0
      %401 = vmatpush1.msra.mxu0 %v384
      %402 = vmatprep.subr.mxu0 0.0
      %403 = vmatpush1.msra.mxu0 %v385
      %404 = vmatprep.subr.mxu0 0.0
      %405 = vmatpush1.msra.mxu0 %v386
      %406 = vmatprep.subr.mxu0 0.0
      %407 = vmatpush1.msra.mxu0 %v387
      %408 = vmatprep.subr.mxu0 0.0
      %409 = vmatpush1.msra.mxu0 %v388
      %410 = vmatprep.subr.mxu0 0.0
      %411 = vmatpush1.msra.mxu0 %v389
      %412 = vmatprep.subr.mxu0 0.0
      %413 = vmatpush1.msra.mxu0 %v390
      %414 = vmatprep.subr.mxu0 0.0
      %415 = vmatpush1.msra.mxu0 %v391
      %416 = vmatprep.subr.mxu0 0.0
      %417 = vmatpush1.msra.mxu0 %v392
      %418 = vmatprep.subr.mxu0 0.0
      %419 = vmatpush1.msra.mxu0 %v393
      %420 = vmatprep.subr.mxu0 0.0
      %421 = vmatpush1.msra.mxu0 %v394
      %422 = vmatprep.subr.mxu0 0.0
      %423 = vmatpush1.msra.mxu0 %v395
      %424 = vmatprep.subr.mxu0 0.0
      %425 = vmatpush1.msra.mxu0 %v396
      %426 = vmatprep.subr.mxu0 0.0
      %427 = vmatpush1.msra.mxu0 %v397
      %428 = vmatprep.subr.mxu0 0.0
      %429 = vmatpush1.msra.mxu0 %v398
      %430 = vmatprep.subr.mxu0 0.0
      %431 = vmatpush1.msra.mxu0 %v399
      %432 = vmatprep.subr.mxu0 0.0
      %433 = vmatpush1.msra.mxu0 0.0
      %434 = vmatprep.subr.mxu0 0.0
      %435 = vmatpush1.msra.mxu0 0.0
      %436 = vmatprep.subr.mxu0 0.0
      %437 = vmatpush1.msra.mxu0 0.0
      %438 = vmatprep.subr.mxu0 0.0
      %439 = vmatpush1.msra.mxu0 0.0
      %440 = vmatprep.subr.mxu0 0.0
      %441 = vmatpush1.msra.mxu0 0.0
      %442 = vmatprep.subr.mxu0 0.0
      %443 = vmatpush1.msra.mxu0 0.0
      %444 = vmatprep.subr.mxu0 0.0
      %445 = vmatpush1.msra.mxu0 0.0
      %446 = vmatprep.subr.mxu0 0.0
      %447 = vmatpush1.msra.mxu0 0.0
      %448 = vmatprep.subr.mxu0 0.0
      %449 = vmatpush1.msra.mxu0 0.0
      %450 = vmatprep.subr.mxu0 0.0
      %451 = vmatpush1.msra.mxu0 0.0
      %452 = vmatprep.subr.mxu0 0.0
      %453 = vmatpush1.msra.mxu0 0.0
      %454 = vmatprep.subr.mxu0 0.0
      %455 = vmatpush1.msra.mxu0 0.0
      %456 = vmatprep.subr.mxu0 0.0
      %457 = vmatpush1.msra.mxu0 0.0
      %458 = vmatprep.subr.mxu0 0.0
      %459 = vmatpush1.msra.mxu0 0.0
      %460 = vmatprep.subr.mxu0 0.0
      %461 = vmatpush1.msra.mxu0 0.0
      %462 = vmatprep.subr.mxu0 0.0
      %463 = vmatpush1.msra.mxu0 0.0
      %464 = vmatprep.mubr.f32.mxu0 0.0
      %465 = vmatmul.mubr.f32.gmra.mrb[0].mxu0 %v361
      %v466 = vpop.f32.mrb[0].mxu0
      %v467 = vadd.f32 0.0, %v466
      %v468 = vpop.f32.mrb[0].mxu0
      %469 = vmatprep.mubr.f32.mxu0 0.0
      %470 = vmatmul.mubr.f32.gmra.mrb[0].mxu0 %v363
      %v471 = vpop.f32.mrb[0].mxu0
      %v472 = vadd.f32 0.0, %v471
      %v473 = vpop.f32.mrb[0].mxu0
      %474 = vmatprep.mubr.f32.mxu0 0.0
      %475 = vmatmul.mubr.f32.gmra.mrb[0].mxu0 %v365
      %v476 = vpop.f32.mrb[0].mxu0
      %v477 = vadd.f32 0.0, %v476
      %v478 = vpop.f32.mrb[0].mxu0
      %479 = vmatprep.mubr.f32.mxu0 0.0
      %480 = vmatmul.mubr.f32.gmra.mrb[0].mxu0 %v367
      %v481 = vpop.f32.mrb[0].mxu0
      %v482 = vadd.f32 0.0, %v481
      %v483 = vpop.f32.mrb[0].mxu0
      %484 = vmatprep.mubr.f32.mxu0 0.0
      %485 = vmatmul.mubr.f32.gmra.mrb[0].mxu0 %v369
      %v486 = vpop.f32.mrb[0].mxu0
      %v487 = vadd.f32 0.0, %v486
      %v488 = vpop.f32.mrb[0].mxu0
      %489 = vmatprep.mubr.f32.mxu0 0.0
      %490 = vmatmul.mubr.f32.gmra.mrb[0].mxu0 %v371
      %v491 = vpop.f32.mrb[0].mxu0
      %v492 = vadd.f32 0.0, %v491
      %v493 = vpop.f32.mrb[0].mxu0
      %494 = vmatprep.mubr.f32.mxu0 0.0
      %495 = vmatmul.mubr.f32.gmra.mrb[0].mxu0 %v373
      %v496 = vpop.f32.mrb[0].mxu0
      %v497 = vadd.f32 0.0, %v496
      %v498 = vpop.f32.mrb[0].mxu0
      %499 = vmatprep.mubr.f32.mxu0 0.0
      %500 = vmatmul.mubr.f32.gmra.mrb[0].mxu0 %v375
      %v501 = vpop.f32.mrb[0].mxu0
      %v502 = vadd.f32 0.0, %v501
      %v503 = vpop.f32.mrb[0].mxu0
      %504 = vdwg.mxu0
      %v505 = vadd.f32 %v376, %v467
      %v506 = vadd.f32 %v377, %v472
      %v507 = vadd.f32 %v378, %v477
      %v508 = vadd.f32 %v379, %v482
      %v509 = vadd.f32 %v380, %v487
      %v510 = vadd.f32 %v381, %v492
      %v511 = vadd.f32 %v382, %v497
      %v512 = vadd.f32 %v383, %v502
      %vm513 = vcmask 15360
      %514 = vst.msk [vmem:[#allocation2] sm:$0xff] %vm513, %v505
      %515 = vst.msk [vmem:[#allocation2 + $0x8] sm:$0xff] %vm513, %v506
      %516 = vst.msk [vmem:[#allocation2 + $0x10] sm:$0xff] %vm513, %v507
      %517 = vst.msk [vmem:[#allocation2 + $0x18] sm:$0xff] %vm513, %v508
      %518 = vst.msk [vmem:[#allocation2 + $0x20] sm:$0xff] %vm513, %v509
      %519 = vst.msk [vmem:[#allocation2 + $0x28] sm:$0xff] %vm513, %v510
      %520 = vst.msk [vmem:[#allocation2 + $0x30] sm:$0xff] %vm513, %v511
      %521 = vst.msk [vmem:[#allocation2 + $0x38] sm:$0xff] %vm513, %v512
      // Predicated region
      $region41: #{tpu_custom_call.1} parent=35 // pred_check
        %p522 = pneg %p268
      $region42: #{tpu_custom_call.1} parent=35 // pred_check_branch
        %524 = sbr.rel (%p522) target = $region44
      $region43: #{tpu_custom_call.1} parent=35 // pred_region
        %v525 = vld [vmem:[#allocation2] sm:$0xff]
        %v526 = vld [vmem:[#allocation2 + $0x8] sm:$0xff]
        %v527 = vld [vmem:[#allocation2 + $0x10] sm:$0xff]
        %v528 = vld [vmem:[#allocation2 + $0x18] sm:$0xff]
        %v529 = vld [vmem:[#allocation2 + $0x20] sm:$0xff]
        %v530 = vld [vmem:[#allocation2 + $0x28] sm:$0xff]
        %v531 = vld [vmem:[#allocation2 + $0x30] sm:$0xff]
        %v532 = vld [vmem:[#allocation2 + $0x38] sm:$0xff]
        %v533 = vld [vmem:[%s256] sm:$0xff]
        %v534 = vld [vmem:[%s256 + $0x8] sm:$0xff]
        %v535 = vld [vmem:[%s256 + $0x10] sm:$0xff]
        %v536 = vld [vmem:[%s256 + $0x18] sm:$0xff]
        %v537 = vld [vmem:[%s256 + $0x20] sm:$0xff]
        %v538 = vld [vmem:[%s256 + $0x28] sm:$0xff]
        %v539 = vld [vmem:[%s256 + $0x30] sm:$0xff]
        %v540 = vld [vmem:[%s256 + $0x38] sm:$0xff]
        %v541 = vmul.f32 %v533, %v525
        %v542 = vmul.f32 %v534, %v526
        %v543 = vmul.f32 %v535, %v527
        %v544 = vmul.f32 %v536, %v528
        %v545 = vmul.f32 %v537, %v529
        %v546 = vmul.f32 %v538, %v530
        %v547 = vmul.f32 %v539, %v531
        %v548 = vmul.f32 %v540, %v532
        %vm549 = vcmask 7168
        %v550 = vsel %vm549, %v541, 0.0
        %v551 = vsel %vm549, %v542, 0.0
        %v552 = vadd.f32 %v550, %v551
        %v553 = vsel %vm549, %v543, 0.0
        %v554 = vadd.f32 %v552, %v553
        %v555 = vsel %vm549, %v544, 0.0
        %v556 = vadd.f32 %v554, %v555
        %v557 = vsel %vm549, %v545, 0.0
        %v558 = vadd.f32 %v556, %v557
        %v559 = vsel %vm549, %v546, 0.0
        %v560 = vadd.f32 %v558, %v559
        %v561 = vsel %vm549, %v547, 0.0
        %v562 = vadd.f32 %v560, %v561
        %v563 = vsel %vm549, %v548, 0.0
        %v564 = vadd.f32 %v562, %v563
        %v565 = vrot.slane %v564, 4
        %v566 = vadd.f32 %v564, %v565
        %v567 = vrot.slane %v566, 2
        %v568 = vadd.f32 %v566, %v567
        %v569 = vrot.slane %v568, 1
        %v570 = vadd.f32 %v568, %v569
        %vm571 = vcmask 0
        %572 = vst.msk [vmem:[%s267] sm:$0x1] %vm571, %v570
        %vm573 = vcmask 15368
        %v574 = vsel %vm573, %v541, 0.0
        %v575 = vsel %vm573, %v542, 0.0
        %v576 = vadd.f32 %v574, %v575
        %v577 = vsel %vm573, %v543, 0.0
        %v578 = vadd.f32 %v576, %v577
        %v579 = vsel %vm573, %v544, 0.0
        %v580 = vadd.f32 %v578, %v579
        %v581 = vsel %vm573, %v545, 0.0
        %v582 = vadd.f32 %v580, %v581
        %v583 = vsel %vm573, %v546, 0.0
        %v584 = vadd.f32 %v582, %v583
        %v585 = vsel %vm573, %v547, 0.0
        %v586 = vadd.f32 %v584, %v585
        %v587 = vsel %vm573, %v548, 0.0
        %v588 = vadd.f32 %v586, %v587
        %v589 = vrot.slane %v588, 4
        %v590 = vadd.f32 %v588, %v589
        %v591 = vrot.slane %v590, 2
        %v592 = vadd.f32 %v590, %v591
        %v593 = vrot.slane %v592, 1
        %v594 = vadd.f32 %v592, %v593
        %596 = vrot.lane.b32.xlu0 %v594, 127
        %v597 = vpop.permute.xlu0 %596
        %599 = vst.msk [vmem:[%s267 + $0x1] sm:$0x1] %vm571, %v597
        %608 = vrot.lane.b32.xlu0 %v525, 127
        %v609 = vpop.permute.xlu0 %608
        %610 = vrot.lane.b32.xlu0 %v526, 127
        %v611 = vpop.permute.xlu0 %610
        %612 = vrot.lane.b32.xlu0 %v527, 127
        %v613 = vpop.permute.xlu0 %612
        %614 = vrot.lane.b32.xlu0 %v528, 127
        %v615 = vpop.permute.xlu0 %614
        %616 = vrot.lane.b32.xlu0 %v529, 127
        %v617 = vpop.permute.xlu0 %616
        %618 = vrot.lane.b32.xlu0 %v530, 127
        %v619 = vpop.permute.xlu0 %618
        %620 = vrot.lane.b32.xlu0 %v531, 127
        %v621 = vpop.permute.xlu0 %620
        %622 = vrot.lane.b32.xlu0 %v532, 127
        %v623 = vpop.permute.xlu0 %622
        %v632 = vmul.f32 %v533, %v609
        %v633 = vmul.f32 %v534, %v611
        %v634 = vmul.f32 %v535, %v613
        %v635 = vmul.f32 %v536, %v615
        %v636 = vmul.f32 %v537, %v617
        %v637 = vmul.f32 %v538, %v619
        %v638 = vmul.f32 %v539, %v621
        %v639 = vmul.f32 %v540, %v623
        %v640 = vsel %vm549, %v632, 0.0
        %v641 = vsel %vm549, %v633, 0.0
        %v642 = vadd.f32 %v640, %v641
        %v643 = vsel %vm549, %v634, 0.0
        %v644 = vadd.f32 %v642, %v643
        %v645 = vsel %vm549, %v635, 0.0
        %v646 = vadd.f32 %v644, %v645
        %v647 = vsel %vm549, %v636, 0.0
        %v648 = vadd.f32 %v646, %v647
        %v649 = vsel %vm549, %v637, 0.0
        %v650 = vadd.f32 %v648, %v649
        %v651 = vsel %vm549, %v638, 0.0
        %v652 = vadd.f32 %v650, %v651
        %v653 = vsel %vm549, %v639, 0.0
        %v654 = vadd.f32 %v652, %v653
        %v655 = vrot.slane %v654, 4
        %v656 = vadd.f32 %v654, %v655
        %v657 = vrot.slane %v656, 2
        %v658 = vadd.f32 %v656, %v657
        %v659 = vrot.slane %v658, 1
        %v660 = vadd.f32 %v658, %v659
        %661 = vst.msk [vmem:[%s267 + $0x2] sm:$0x1] %vm571, %v660
      $region44: #{tpu_custom_call.1} parent=35 // pred_fallthru
        _
      %p662 = scmp.lt.s32.totalorder %s19, 1
      %s663 = scalar_select %p662, %s19, 1
      %s664 = smul.addr %s663, 4
      %s665 = scalar_lea.vmem %s4, %s664
      // Predicated region
      $region45: #{tpu_custom_call.1} parent=35 // pred_check
        %p666 = pneg %p149
      $region46: #{tpu_custom_call.1} parent=35 // pred_check_branch
        %668 = sbr.rel (%p666) target = $region48
      $region47: #{tpu_custom_call.1} parent=35 // pred_region
        _
      $region48: #{tpu_custom_call.1} parent=35 // pred_fallthru
        _
    $region36: #{tpu_custom_call.1} parent=5 // pred_fallthru
      _
    %p669 = scmp.le.s32.totalorder 2, %s10
    // Predicated region
    $region49: #{tpu_custom_call.1} parent=5 // pred_check
      %p670 = pneg %p669
    $region50: #{tpu_custom_call.1} parent=5 // pred_check_branch
      %672 = sbr.rel (%p670) target = $region52
    $region51: #{tpu_custom_call.1} parent=5 // pred_region
      %s673 = ssub.s32 %s10, 2
      // Predicated region
      $region53: #{tpu_custom_call.1} parent=51 // pred_check
        %p674 = pneg %p155
      $region54: #{tpu_custom_call.1} parent=51 // pred_check_branch
        %676 = sbr.rel (%p674) target = $region56
      $region55: #{tpu_custom_call.1} parent=51 // pred_region
        %p677 = scmp.lt.s32.totalorder %s21, 1
        %s678 = scalar_select %p677, %s21, 1
        %s679 = smul.addr %s678, 4
        %s680 = scalar_lea.vmem %s4, %s679
      $region56: #{tpu_custom_call.1} parent=51 // pred_fallthru
        _
    $region52: #{tpu_custom_call.1} parent=5 // pred_fallthru
      _
  $region6: #{tpu_custom_call.1} parent=0 // loop_footer
    %s14 = sadd.s32 1, %s10
  $region7: #{tpu_custom_call.1} parent=0 // loop_footer_branch
    %9 = sbr.rel target = $region3
  $region8: #{tpu_custom_call.1} parent=0 // loop_exit
    _

</llo_original>
